<compile_context>
chip_gen: v6e
topology: v6e:2x2x1
jax: 0.10.0
libtpu: 0.0.40
codegen_flags: <defaults>
</compile_context>

<pallas_src>
import jax
import jax.numpy as jnp
from jax.experimental import pallas as pl
from jax.experimental.pallas import tpu as pltpu


# ----------------------------------------------------------------------------
# 1) meta_net MLP: one tiny whole-batch pallas_call (runs once, not per tile)
# ----------------------------------------------------------------------------
def _meta_net_kernel(x_ref, w1_ref, b1_ref, w2_ref, b2_ref, o_ref):
    h = jnp.dot(x_ref[...], w1_ref[...],
                preferred_element_type=jnp.float32) + b1_ref[...]
    h = jnp.maximum(h, 0.0)                                   # ReLU
    o_ref[...] = jnp.dot(h, w2_ref[...],
                         preferred_element_type=jnp.float32) + b2_ref[...]


def meta_net_bias(im_features, w1, b1, w2, b2):
    B = im_features.shape[0]
    D = w2.shape[1]
    return pl.pallas_call(
        _meta_net_kernel,
        out_shape=jax.ShapeDtypeStruct((B, D), jnp.float32),
    )(im_features.astype(jnp.float32), w1, b1, w2, b2)


# ----------------------------------------------------------------------------
# 2) prompt assembly kernel: one template-tile copy + one ctx-span shift per
#    (class tile, batch element) grid cell.  Lane-dense stores (full D).
# ----------------------------------------------------------------------------
def _make_assemble_kernel(ctx_off, n_ctx):
    def kernel(tmpl_ref, bias_ref, out_ref):
        tmpl = tmpl_ref[...]                                  # (ct, L, D)
        out_ref[...] = tmpl                                   # one big aligned copy
        span = tmpl[:, ctx_off:ctx_off + n_ctx, :].astype(jnp.float32)
        shifted = span + bias_ref[...][None, :, :]            # bias (1,1,D), f32 add
        out_ref[:, ctx_off:ctx_off + n_ctx, :] = shifted.astype(out_ref.dtype)
    return kernel


def _pick_class_tile(n_cls, L, D, itemsize, vmem_budget_bytes):
    # double-buffered template block + double-buffered output block per step
    per_class_row = 4 * L * D * itemsize
    cap = max(1, vmem_budget_bytes // per_class_row)
    ct = 1
    for d in range(1, n_cls + 1):                 # largest divisor of n_cls <= cap
        if n_cls % d == 0 and d <= cap:
            ct = d
    return ct


# ----------------------------------------------------------------------------
# wrapper: meta_net bias (once) -> template (once) -> tiled assembly kernel
# ----------------------------------------------------------------------------
def prompt_learner_forward(im_features, params, *, use_atp, atp_num,
                           class_tile=None, out_dtype=jnp.float32,
                           vmem_budget_bytes=32 << 20,
                           vmem_limit_bytes=48 << 20):
    B, _ = im_features.shape
    ctx = params["ctx"]
    prefix = params["token_prefix"]
    suffix = params["token_suffix"]
    n_cls = prefix.shape[0]
    n_ctx, D = ctx.shape

    # --- meta_net bias for the whole batch (single small kernel) -------------
    bias = meta_net_bias(im_features, params["w1"], params["b1"],
                         params["w2"], params["b2"])          # (B, D) f32
    bias3 = bias.reshape(B, 1, D)

    # --- batch-independent prompt template, built once outside the kernel ----
    segs = [prefix]
    ctx_off = 1
    if use_atp:
        for a in range(1, atp_num + 1):
            att = params[f"ctx_att{a}"]
            segs.append(jnp.broadcast_to(att[None], (n_cls,) + att.shape))
            segs.append(params[f"token_middle{a}"])
            ctx_off += att.shape[0] + 1
    segs.append(jnp.broadcast_to(ctx[None], (n_cls, n_ctx, D)))
    segs.append(suffix)
    template = jnp.concatenate(segs, axis=1).astype(out_dtype)   # (n_cls, L, D)
    L = template.shape[1]

    # --- class tile sizing ----------------------------------------------------
    if class_tile is None:
        ct = _pick_class_tile(n_cls, L, D, jnp.dtype(out_dtype).itemsize,
                              vmem_budget_bytes)
    else:
        ct = class_tile
    assert n_cls % ct == 0, "class_tile must divide n_cls"

    kernel = _make_assemble_kernel(ctx_off, n_ctx)

    return pl.pallas_call(
        kernel,
        out_shape=jax.ShapeDtypeStruct((B, n_cls, L, D), out_dtype),
        grid=(n_cls // ct, B),                    # class tiles OUTER, batch INNER
        in_specs=[
            # template block index is constant across the inner (batch) axis ->
            # stays resident in VMEM instead of being re-DMA'd per image.
            pl.BlockSpec((ct, L, D), lambda j, i: (j, 0, 0)),
            pl.BlockSpec((None, 1, D), lambda j, i: (i, 0, 0)),   # per-image bias
        ],
        out_specs=pl.BlockSpec((None, ct, L, D), lambda j, i: (i, j, 0, 0)),
        compiler_params=pltpu.CompilerParams(
            dimension_semantics=("parallel", "arbitrary"),
            vmem_limit_bytes=vmem_limit_bytes),
    )(template, bias3)


# ----------------------------------------------------------------------------
# deterministic synthetic parameters (stand-ins for the CLIP-derived buffers)
# ----------------------------------------------------------------------------
# TODO(synk): tokenizer / clip.tokenize / token_embedding in __init__ are
# host-side preprocessing with no Pallas equivalent; the resulting buffers
# (token_prefix / token_middle* / token_suffix) are synthesized here.
def init_params(key, *, n_cls, n_ctx, vis_dim, ctx_dim, n_suffix,
                use_atp, atp_num, att_lens):
    hid = vis_dim // 16
    ks = iter(jax.random.split(key, 16))
    p = dict(
        w1=0.1 * jax.random.normal(next(ks), (vis_dim, hid), jnp.float32),
        b1=0.1 * jax.random.normal(next(ks), (1, hid), jnp.float32),
        w2=0.1 * jax.random.normal(next(ks), (hid, ctx_dim), jnp.float32),
        b2=0.1 * jax.random.normal(next(ks), (1, ctx_dim), jnp.float32),
        ctx=0.02 * jax.random.normal(next(ks), (n_ctx, ctx_dim), jnp.float32),
        token_prefix=0.02 * jax.random.normal(next(ks), (n_cls, 1, ctx_dim), jnp.float32),
        token_suffix=0.02 * jax.random.normal(next(ks), (n_cls, n_suffix, ctx_dim), jnp.float32),
    )
    if use_atp:
        for a in range(1, atp_num + 1):
            p[f"ctx_att{a}"] = 0.01 * jax.random.normal(
                next(ks), (att_lens[a - 1], ctx_dim), jnp.float32)
            p[f"token_middle{a}"] = 0.02 * jax.random.normal(
                next(ks), (n_cls, 1, ctx_dim), jnp.float32)
    return p


# ----------------------------------------------------------------------------
# pure-JAX reference (mirrors the PyTorch forward) for correctness check
# ----------------------------------------------------------------------------
def reference_forward(im_features, params, *, use_atp, atp_num):
    h = jnp.maximum(im_features @ params["w1"] + params["b1"], 0.0)
    bias = h @ params["w2"] + params["b2"]                       # (B, D)
    ctx_shifted = params["ctx"][None, :, :] + bias[:, None, :]   # (B, n_ctx, D)
    n_cls = params["token_prefix"].shape[0]
    prompts = []
    for b in range(ctx_shifted.shape[0]):
        segs = [params["token_prefix"]]
        if use_atp:
            for a in range(1, atp_num + 1):
                att = params[f"ctx_att{a}"]
                segs.append(jnp.broadcast_to(att[None], (n_cls,) + att.shape))
                segs.append(params[f"token_middle{a}"])
        segs.append(jnp.broadcast_to(ctx_shifted[b][None],
                                     (n_cls,) + ctx_shifted[b].shape))
        segs.append(params["token_suffix"])
        prompts.append(jnp.concatenate(segs, axis=1))
    return jnp.stack(prompts, axis=0)


if __name__ == "__main__":
    B, n_cls, n_ctx = 2, 4, 4
    vis_dim = ctx_dim = 128          # lane-aligned small sizes
    n_suffix = 5
    att_lens = (2, 2, 2)

    key = jax.random.PRNGKey(0)
    kp, kf = jax.random.split(key)
    im_features = jax.random.normal(kf, (B, vis_dim), jnp.float32)

    # --- ATPrompt path (use_atp=True, atp_num=2): L = 1+2+1+2+1+4+5 = 16 -----
    params_atp = init_params(kp, n_cls=n_cls, n_ctx=n_ctx, vis_dim=vis_dim,
                             ctx_dim=ctx_dim, n_suffix=n_suffix,
                             use_atp=True, atp_num=2, att_lens=att_lens)
    out_atp = prompt_learner_forward(im_features, params_atp,
                                     use_atp=True, atp_num=2, class_tile=2)
    out_atp = jax.block_until_ready(out_atp)
    ref_atp = reference_forward(im_features, params_atp, use_atp=True, atp_num=2)
    assert out_atp.shape == ref_atp.shape, (out_atp.shape, ref_atp.shape)
    assert jnp.allclose(out_atp, ref_atp, atol=1e-4, rtol=1e-4)

    # --- plain CoCoOp path (use_atp=False), auto class tile: L = 1+4+5 = 10 --
    params_base = init_params(kp, n_cls=n_cls, n_ctx=n_ctx, vis_dim=vis_dim,
                              ctx_dim=ctx_dim, n_suffix=n_suffix,
                              use_atp=False, atp_num=0, att_lens=())
    out_base = prompt_learner_forward(im_features, params_base,
                                      use_atp=False, atp_num=0)
    out_base = jax.block_until_ready(out_base)
    ref_base = reference_forward(im_features, params_base, use_atp=False, atp_num=0)
    assert out_base.shape == ref_base.shape, (out_base.shape, ref_base.shape)
    assert jnp.allclose(out_base, ref_base, atol=1e-4, rtol=1e-4)

    # --- bf16 output path (halved HBM write traffic), relaxed tolerance ------
    out_bf16 = prompt_learner_forward(im_features, params_atp,
                                      use_atp=True, atp_num=2,
                                      out_dtype=jnp.bfloat16)
    out_bf16 = jax.block_until_ready(out_bf16)
    assert jnp.allclose(out_bf16.astype(jnp.float32), ref_atp,
                        atol=2e-2, rtol=2e-2)

    print("KERNEL_OK")
</pallas_src>

<mosaic_0001>
module attributes {stable_mosaic.version = 11 : i64} {
  func.func @_meta_net_kernel(%arg0: memref<2x128xf32, #tpu.memory_space<vmem>>, %arg1: memref<128x8xf32, #tpu.memory_space<vmem>>, %arg2: memref<1x8xf32, #tpu.memory_space<vmem>>, %arg3: memref<8x128xf32, #tpu.memory_space<vmem>>, %arg4: memref<1x128xf32, #tpu.memory_space<vmem>>, %arg5: memref<2x128xf32, #tpu.memory_space<vmem>>) attributes {dimension_semantics = [], scalar_prefetch = 0 : i64, scratch_operands = 0 : i64, tpu.core_type = #tpu.core_type<tc>} {
    %c0 = arith.constant 0 : index
    %c0_0 = arith.constant 0 : index
    %0 = vector.load %arg0[%c0, %c0_0] : memref<2x128xf32, #tpu.memory_space<vmem>>, vector<2x128xf32>
    %c0_1 = arith.constant 0 : index
    %c0_2 = arith.constant 0 : index
    %1 = vector.load %arg1[%c0_1, %c0_2] : memref<128x8xf32, #tpu.memory_space<vmem>>, vector<128x8xf32>
    %cst = arith.constant dense<0.000000e+00> : vector<2x8xf32>
    %2 = tpu.matmul %0, %1, %cst {dimension_numbers = #tpu.dot_dimension_numbers<[1], [0], [0], [1], [0, 0, 1, 1], [], []>} : vector<2x128xf32>, vector<128x8xf32>, vector<2x8xf32> -> vector<2x8xf32>
    %c0_3 = arith.constant 0 : index
    %c0_4 = arith.constant 0 : index
    %3 = vector.load %arg2[%c0_3, %c0_4] : memref<1x8xf32, #tpu.memory_space<vmem>>, vector<1x8xf32>
    %4 = vector.broadcast %3 : vector<1x8xf32> to vector<2x8xf32>
    %5 = arith.addf %2, %4 : vector<2x8xf32>
    %cst_5 = arith.constant 0.000000e+00 : f32
    %6 = vector.broadcast %cst_5 : f32 to vector<2x8xf32>
    %7 = arith.maximumf %5, %6 : vector<2x8xf32>
    %c0_6 = arith.constant 0 : index
    %c0_7 = arith.constant 0 : index
    %8 = vector.load %arg3[%c0_6, %c0_7] : memref<8x128xf32, #tpu.memory_space<vmem>>, vector<8x128xf32>
    %cst_8 = arith.constant dense<0.000000e+00> : vector<2x128xf32>
    %9 = tpu.matmul %7, %8, %cst_8 {dimension_numbers = #tpu.dot_dimension_numbers<[1], [0], [0], [1], [0, 0, 1, 1], [], []>} : vector<2x8xf32>, vector<8x128xf32>, vector<2x128xf32> -> vector<2x128xf32>
    %c0_9 = arith.constant 0 : index
    %c0_10 = arith.constant 0 : index
    %10 = vector.load %arg4[%c0_9, %c0_10] : memref<1x128xf32, #tpu.memory_space<vmem>>, vector<1x128xf32>
    %11 = vector.broadcast %10 : vector<1x128xf32> to vector<2x128xf32>
    %12 = arith.addf %9, %11 : vector<2x128xf32>
    %c0_11 = arith.constant 0 : index
    %c0_12 = arith.constant 0 : index
    %13 = vector.load %arg5[%c0_11, %c0_12] : memref<2x128xf32, #tpu.memory_space<vmem>>, vector<2x128xf32>
    tpu.vector_store %arg5[%c0_11, %c0_12], %12 {strides = array<i32>} : memref<2x128xf32, #tpu.memory_space<vmem>>, vector<2x128xf32>,
    return
  }
}

</mosaic_0001>

<llo_original>
// kernel: tpu_custom_call.1
$region0: #{tpu_custom_call.1}
  #allocation0 [shape = 'u32[]', space=smem, size = 0x4, offset = 0x4, fixed_abs, tag = 'smem constant byte address 0x4 - core index']
  #allocation1 [shape = 'u32[144,128]{1,0:T(1,128)}', space=vmem, size = 0x12000, scoped, tag = 'internal scratch']
  %s0 = inlined_call_operand.vmem [shape: f32[2,128], index: 0, kind: input, shape index: {}]
  %s1 = inlined_call_operand.vmem [shape: f32[128,8], index: 1, kind: input, shape index: {}]
  %s2 = inlined_call_operand.vmem [shape: f32[1,8], index: 2, kind: input, shape index: {}]
  %s3 = inlined_call_operand.vmem [shape: f32[8,128], index: 3, kind: input, shape index: {}]
  %s4 = inlined_call_operand.vmem [shape: f32[1,128], index: 4, kind: input, shape index: {}]
  %s5 = inlined_call_operand.hbm [shape: f32[2,128], index: 5, kind: output, shape index: {}]
  %s6 = sld [smem:[#allocation0]]
  $region30: #{tpu_custom_call.1} parent=0
    _
  %s8 = ssub.s32 1, %s6
  %s9 = scalar_select 0, %s8, %s6
  $region1: #{tpu_custom_call.1} parent=0
    #allocation2 [shape = 'u8[1024]{0}', space=vmem, size = 0x400, scoped, tag = 'output window, operand 0, single buffered']
    #allocation3 [shape = 's32[1]{0}', space=sflag, size = 0x4, scoped, tag = 'scoped memory for tpu_custom_call.1']
    %10 = vsyncpa [#allocation3], 0
    // Predicated region
    $region2: #{tpu_custom_call.1} parent=1 // pred_check
      _
    $region3: #{tpu_custom_call.1} parent=1 // pred_check_branch
      %12 = sbr.rel (0) target = $region5
    $region4: #{tpu_custom_call.1} parent=1 // pred_region
      _
    $region5: #{tpu_custom_call.1} parent=1 // pred_fallthru
      _
    // Predicated region
    $region6: #{tpu_custom_call.1} parent=1 // pred_check
      _
    $region7: #{tpu_custom_call.1} parent=1 // pred_check_branch
      %14 = sbr.rel (0) target = $region9
    $region8: #{tpu_custom_call.1} parent=1 // pred_region
      _
    $region9: #{tpu_custom_call.1} parent=1 // pred_fallthru
      _
    // Predicated region
    $region10: #{tpu_custom_call.1} parent=1 // pred_check
      _
    $region11: #{tpu_custom_call.1} parent=1 // pred_check_branch
      %16 = sbr.rel (0) target = $region13
    $region12: #{tpu_custom_call.1} parent=1 // pred_region
      _
    $region13: #{tpu_custom_call.1} parent=1 // pred_fallthru
      _
    // Predicated region
    $region14: #{tpu_custom_call.1} parent=1 // pred_check
      _
    $region15: #{tpu_custom_call.1} parent=1 // pred_check_branch
      %18 = sbr.rel (0) target = $region17
    $region16: #{tpu_custom_call.1} parent=1 // pred_region
      _
    $region17: #{tpu_custom_call.1} parent=1 // pred_fallthru
      _
    // Predicated region
    $region18: #{tpu_custom_call.1} parent=1 // pred_check
      _
    $region19: #{tpu_custom_call.1} parent=1 // pred_check_branch
      %20 = sbr.rel (0) target = $region21
    $region20: #{tpu_custom_call.1} parent=1 // pred_region
      _
    $region21: #{tpu_custom_call.1} parent=1 // pred_fallthru
      _
    %v21 = vld [vmem:[%s0] sm:$0x3]
    %v22 = vld [vmem:[%s1] sm:$0xff]
    %v23 = vld [vmem:[%s1 + $0x8] sm:$0xff]
    %v24 = vld [vmem:[%s1 + $0x10] sm:$0xff]
    %v25 = vld [vmem:[%s1 + $0x18] sm:$0xff]
    %v26 = vld [vmem:[%s1 + $0x20] sm:$0xff]
    %v27 = vld [vmem:[%s1 + $0x28] sm:$0xff]
    %v28 = vld [vmem:[%s1 + $0x30] sm:$0xff]
    %v29 = vld [vmem:[%s1 + $0x38] sm:$0xff]
    %v30 = vld [vmem:[%s1 + $0x40] sm:$0xff]
    %v31 = vld [vmem:[%s1 + $0x48] sm:$0xff]
    %v32 = vld [vmem:[%s1 + $0x50] sm:$0xff]
    %v33 = vld [vmem:[%s1 + $0x58] sm:$0xff]
    %v34 = vld [vmem:[%s1 + $0x60] sm:$0xff]
    %v35 = vld [vmem:[%s1 + $0x68] sm:$0xff]
    %v36 = vld [vmem:[%s1 + $0x70] sm:$0xff]
    %v37 = vld [vmem:[%s1 + $0x78] sm:$0xff]
    %v38 = vld [vmem:[%s2] sm:$0x1]
    %v40 = vlaneseq
    %v41 = vshrl.u32 %v40, 7
    %v42 = vsub.s32 0, %v41
    %v43 = vrot.slane %v38, %v42
    %45 = vmatprep.subr.mxu0 0.0
    %46 = vmatpush1.msra.mxu0 %v37
    %47 = vmatprep.subr.mxu0 0.0
    %48 = vmatpush1.msra.mxu0 %v36
    %49 = vmatprep.subr.mxu0 0.0
    %50 = vmatpush1.msra.mxu0 %v35
    %51 = vmatprep.subr.mxu0 0.0
    %52 = vmatpush1.msra.mxu0 %v34
    %53 = vmatprep.subr.mxu0 0.0
    %54 = vmatpush1.msra.mxu0 %v33
    %55 = vmatprep.subr.mxu0 0.0
    %56 = vmatpush1.msra.mxu0 %v32
    %57 = vmatprep.subr.mxu0 0.0
    %58 = vmatpush1.msra.mxu0 %v31
    %59 = vmatprep.subr.mxu0 0.0
    %60 = vmatpush1.msra.mxu0 %v30
    %61 = vmatprep.subr.mxu0 0.0
    %62 = vmatpush1.msra.mxu0 %v29
    %63 = vmatprep.subr.mxu0 0.0
    %64 = vmatpush1.msra.mxu0 %v28
    %65 = vmatprep.subr.mxu0 0.0
    %66 = vmatpush1.msra.mxu0 %v27
    %67 = vmatprep.subr.mxu0 0.0
    %68 = vmatpush1.msra.mxu0 %v26
    %69 = vmatprep.subr.mxu0 0.0
    %70 = vmatpush1.msra.mxu0 %v25
    %71 = vmatprep.subr.mxu0 0.0
    %72 = vmatpush1.msra.mxu0 %v24
    %73 = vmatprep.subr.mxu0 0.0
    %74 = vmatpush1.msra.mxu0 %v23
    %75 = vmatprep.subr.mxu0 0.0
    %76 = vmatpush1.msra.mxu0 %v22
    %77 = vmatprep.subr.mxu0 0.0
    %78 = vmatpush2.msra.mxu0 0.0
    %79 = vmatprep.subr.mxu0 0.0
    %80 = vmatpush2.msra.mxu0 0.0
    %81 = vmatprep.subr.mxu0 0.0
    %82 = vmatpush2.msra.mxu0 0.0
    %83 = vmatprep.subr.mxu0 0.0
    %84 = vmatpush2.msra.mxu0 0.0
    %85 = vmatprep.subr.mxu0 0.0
    %86 = vmatpush2.msra.mxu0 0.0
    %87 = vmatprep.subr.mxu0 0.0
    %88 = vmatpush2.msra.mxu0 0.0
    %89 = vmatprep.subr.mxu0 0.0
    %90 = vmatpush2.msra.mxu0 0.0
    %91 = vmatprep.subr.mxu0 0.0
    %92 = vmatpush2.msra.mxu0 0.0
    %93 = vmatprep.subr.mxu0 0.0
    %94 = vmatpush2.msra.mxu0 0.0
    %95 = vmatprep.subr.mxu0 0.0
    %96 = vmatpush2.msra.mxu0 0.0
    %97 = vmatprep.subr.mxu0 0.0
    %98 = vmatpush2.msra.mxu0 0.0
    %99 = vmatprep.subr.mxu0 0.0
    %100 = vmatpush2.msra.mxu0 0.0
    %101 = vmatprep.subr.mxu0 0.0
    %102 = vmatpush2.msra.mxu0 0.0
    %103 = vmatprep.subr.mxu0 0.0
    %104 = vmatpush2.msra.mxu0 0.0
    %105 = vmatprep.subr.mxu0 0.0
    %106 = vmatpush2.msra.mxu0 0.0
    %107 = vmatprep.subr.mxu0 0.0
    %108 = vmatpush2.msra.mxu0 0.0
    %109 = vmatprep.mubr.f32.mxu0 0.0
    %110 = vmatmul.mubr.f32.gmra.mxu0 %v21
    %v111 = vpop.f32.mrf.mxu0
    %v112 = vadd.f32 %v43, %v111
    %v113 = vpop.f32.mrf.mxu0
    %114 = vdwg.mxu0
    %v115 = vmax.f32 %v112, 0.0
    %v116 = vld [vmem:[%s3] sm:$0xff]
    %v117 = vld [vmem:[%s4] sm:$0x1]
    %v119 = vlaneseq
    %v120 = vshrl.u32 %v119, 7
    %v121 = vsub.s32 0, %v120
    %v122 = vrot.slane %v117, %v121
    %vm124 = vcmask 64512
    %v126 = vsel %vm124, %v115, 0
    %128 = vmatprep.subr.mxu0 0.0
    %129 = vmatpush1.msra.mxu0 0.0
    %130 = vmatprep.subr.mxu0 0.0
    %131 = vmatpush1.msra.mxu0 0.0
    %132 = vmatprep.subr.mxu0 0.0
    %133 = vmatpush1.msra.mxu0 0.0
    %134 = vmatprep.subr.mxu0 0.0
    %135 = vmatpush1.msra.mxu0 0.0
    %136 = vmatprep.subr.mxu0 0.0
    %137 = vmatpush1.msra.mxu0 0.0
    %138 = vmatprep.subr.mxu0 0.0
    %139 = vmatpush1.msra.mxu0 0.0
    %140 = vmatprep.subr.mxu0 0.0
    %141 = vmatpush1.msra.mxu0 0.0
    %142 = vmatprep.subr.mxu0 0.0
    %143 = vmatpush1.msra.mxu0 0.0
    %144 = vmatprep.subr.mxu0 0.0
    %145 = vmatpush1.msra.mxu0 0.0
    %146 = vmatprep.subr.mxu0 0.0
    %147 = vmatpush1.msra.mxu0 0.0
    %148 = vmatprep.subr.mxu0 0.0
    %149 = vmatpush1.msra.mxu0 0.0
    %150 = vmatprep.subr.mxu0 0.0
    %151 = vmatpush1.msra.mxu0 0.0
    %152 = vmatprep.subr.mxu0 0.0
    %153 = vmatpush1.msra.mxu0 0.0
    %154 = vmatprep.subr.mxu0 0.0
    %155 = vmatpush1.msra.mxu0 0.0
    %156 = vmatprep.subr.mxu0 0.0
    %157 = vmatpush1.msra.mxu0 0.0
    %158 = vmatprep.subr.mxu0 0.0
    %159 = vmatpush1.msra.mxu0 %v116
    %160 = vmatprep.subr.mxu0 0.0
    %161 = vmatpush2.msra.mxu0 0.0
    %162 = vmatprep.subr.mxu0 0.0
    %163 = vmatpush2.msra.mxu0 0.0
    %164 = vmatprep.subr.mxu0 0.0
    %165 = vmatpush2.msra.mxu0 0.0
    %166 = vmatprep.subr.mxu0 0.0
    %167 = vmatpush2.msra.mxu0 0.0
    %168 = vmatprep.subr.mxu0 0.0
    %169 = vmatpush2.msra.mxu0 0.0
    %170 = vmatprep.subr.mxu0 0.0
    %171 = vmatpush2.msra.mxu0 0.0
    %172 = vmatprep.subr.mxu0 0.0
    %173 = vmatpush2.msra.mxu0 0.0
    %174 = vmatprep.subr.mxu0 0.0
    %175 = vmatpush2.msra.mxu0 0.0
    %176 = vmatprep.subr.mxu0 0.0
    %177 = vmatpush2.msra.mxu0 0.0
    %178 = vmatprep.subr.mxu0 0.0
    %179 = vmatpush2.msra.mxu0 0.0
    %180 = vmatprep.subr.mxu0 0.0
    %181 = vmatpush2.msra.mxu0 0.0
    %182 = vmatprep.subr.mxu0 0.0
    %183 = vmatpush2.msra.mxu0 0.0
    %184 = vmatprep.subr.mxu0 0.0
    %185 = vmatpush2.msra.mxu0 0.0
    %186 = vmatprep.subr.mxu0 0.0
    %187 = vmatpush2.msra.mxu0 0.0
    %188 = vmatprep.subr.mxu0 0.0
    %189 = vmatpush2.msra.mxu0 0.0
    %190 = vmatprep.subr.mxu0 0.0
    %191 = vmatpush2.msra.mxu0 0.0
    %192 = vmatprep.mubr.f32.mxu0 0.0
    %193 = vmatmul.mubr.f32.gmra.mxu0 %v126
    %v194 = vpop.f32.mrf.mxu0
    %v195 = vadd.f32 %v122, %v194
    %v196 = vpop.f32.mrf.mxu0
    %197 = vdwg.mxu0
    %198 = vst [vmem:[#allocation2] sm:$0x3] %v195
    // Predicated region
    $region22: #{tpu_custom_call.1} parent=1 // pred_check
      _
    $region23: #{tpu_custom_call.1} parent=1 // pred_check_branch
      %200 = sbr.rel (0) target = $region25
    $region24: #{tpu_custom_call.1} parent=1 // pred_region
      %s202 = ssub.s32 32, 32
      %203 = vsyncadd [#allocation3], %s202
      %s205 = sshll.u32 [#allocation2], 4
      %s206 = int_to_ptr.vmem [resolvable:$true] %s205
      %208 = dma.vmem_to_hbm [thread:$0]  %s206, 32, %s5, [#allocation3]
    $region25: #{tpu_custom_call.1} parent=1 // pred_fallthru
      _
    // Predicated region
    $region26: #{tpu_custom_call.1} parent=1 // pred_check
      _
    $region27: #{tpu_custom_call.1} parent=1 // pred_check_branch
      %210 = sbr.rel (0) target = $region29
    $region28: #{tpu_custom_call.1} parent=1 // pred_region
      %211 = dma.done [#allocation3], 32
    $region29: #{tpu_custom_call.1} parent=1 // pred_fallthru
      _
    %212 = vsyncpa [#allocation3], 1

</llo_original>
